<compile_context>
chip_gen: v5e
topology: v5e:2x2
jax: 0.10.0
libtpu: 0.0.40
codegen_flags: <defaults>
</compile_context>

<pallas_src>
import jax
import jax.numpy as jnp
from jax.experimental import pallas as pl
from jax.experimental.pallas import tpu as pltpu


def _round_up(n, m):
    return ((n + m - 1) // m) * m


def _mlp_kernel(x_ref, w1_ref, b1_ref, w2_ref, b2_ref, w3_ref, b3_ref, o_ref):
    # x_ref: (D_in, TB) in the matmul dtype (batch on the lane axis).
    # w1/w2: (H, D_in)/(H, H) matmul dtype; biases/w3/b3: f32.

    # Layer 1: (H, D_in) @ (D_in, TB) -> (H, TB), f32 accumulate on the MXU.
    h1 = jnp.dot(w1_ref[...], x_ref[...], preferred_element_type=jnp.float32)
    h1 = jnp.maximum(h1 + b1_ref[...], 0.0)

    # Layer 2: cast only the dot operand to the MXU dtype; epilogue stays f32.
    h2 = jnp.dot(w2_ref[...], h1.astype(w2_ref.dtype),
                 preferred_element_type=jnp.float32)
    h2 = jnp.maximum(h2 + b2_ref[...], 0.0)

    # Layer 3 (hidden -> 1): VPU multiply + sublane reduce instead of a 1-wide
    # MXU matmul; result is already lane-dense (1, TB).
    z = jnp.sum(h2 * w3_ref[...], axis=0, keepdims=True) + b3_ref[...]

    # Sigmoid: exp on the EUP, reciprocal also on the EUP (approx).
    o_ref[...] = pl.reciprocal(1.0 + jnp.exp(-z), approx=True).astype(o_ref.dtype)


def deepset_discriminator(x, params, *, tile_b=512, matmul_dtype=jnp.bfloat16):
    """x: [B, output_dim] f32 -> [B, 1] f32 sigmoid probabilities."""
    w1, b1, w2, b2, w3, b3 = params
    B, D = x.shape

    # Batch tile: lane axis, so a multiple of 128; cap at tile_b rows.
    tb = min(_round_up(tile_b, 128), _round_up(B, 128))
    b_pad = _round_up(B, tb)
    n_tiles = b_pad // tb

    # Pad batch, put it on the lane axis, and cast MXU operands to bf16.
    x_t = jnp.pad(x, ((0, b_pad - B), (0, 0))).T.astype(matmul_dtype)
    w1c = w1.astype(matmul_dtype)
    w2c = w2.astype(matmul_dtype)

    # Constant block index -> operand is DMA'd once and stays VMEM-resident.
    const = lambda a: pl.BlockSpec(a.shape, lambda i: (0,) * a.ndim)

    out = pl.pallas_call(
        _mlp_kernel,
        out_shape=jax.ShapeDtypeStruct((1, b_pad), jnp.float32),
        grid=(n_tiles,),
        in_specs=[
            pl.BlockSpec((D, tb), lambda i: (0, i)),   # streamed x tile
            const(w1c), const(b1), const(w2c), const(b2), const(w3), const(b3),
        ],
        out_specs=pl.BlockSpec((1, tb), lambda i: (0, i)),  # lane-dense output
        compiler_params=pltpu.CompilerParams(
            dimension_semantics=("parallel",),          # v7x: shard over 2 TCs
            vmem_limit_bytes=32 * 1024 * 1024,          # explicit, fits v7x too
        ),
    )(x_t, w1c, b1, w2c, b2, w3, b3)

    return out[0, :B].reshape(B, 1)


def init_params(key, output_dim, hidden_dim):
    """nn.Linear default init, weights kept in PyTorch [out, in] layout.

    w3 is stored transposed as (hidden, 1) and biases as column vectors so
    they broadcast directly in the transposed (batch-on-lanes) kernel.
    """
    def linear(key, fan_in, fan_out):
        kw, kb = jax.random.split(key)
        bound = 1.0 / (fan_in ** 0.5)
        w = jax.random.uniform(kw, (fan_out, fan_in), jnp.float32, -bound, bound)
        b = jax.random.uniform(kb, (fan_out, 1), jnp.float32, -bound, bound)
        return w, b

    k1, k2, k3 = jax.random.split(key, 3)
    w1, b1 = linear(k1, output_dim, hidden_dim)
    w2, b2 = linear(k2, hidden_dim, hidden_dim)
    w3, b3 = linear(k3, hidden_dim, 1)
    return (w1, b1, w2, b2, w3.T, b3)   # w3: (hidden, 1), b3: (1, 1)


def _reference(x, params, matmul_dtype=jnp.bfloat16):
    """Pure-JAX reference mirroring the kernel's matmul precision."""
    w1, b1, w2, b2, w3, b3 = params
    f = lambda a: a.astype(matmul_dtype).astype(jnp.float32)
    h1 = jax.nn.relu(f(x) @ f(w1).T + b1.T)
    h2 = jax.nn.relu(f(h1) @ f(w2).T + b2.T)
    z = h2 @ w3 + b3            # layer 3 is f32 in the kernel too
    return jax.nn.sigmoid(z)


if __name__ == "__main__":
    output_dim = 16   # feature dim of each set element
    hidden_dim = 32

    key = jax.random.PRNGKey(0)
    kx, kp, kx2 = jax.random.split(key, 3)
    params = init_params(kp, output_dim, hidden_dim)

    # Small case (single tile, heavy padding).
    x = jax.random.normal(kx, (8, output_dim), jnp.float32)
    out = deepset_discriminator(x, params)
    jax.block_until_ready(out)
    ref = _reference(x, params)
    assert out.shape == (8, 1)
    assert jnp.allclose(out, ref, atol=1e-2, rtol=1e-2), \
        float(jnp.max(jnp.abs(out - ref)))

    # Multi-tile case: grid > 1, batch not a multiple of the tile.
    x2 = jax.random.normal(kx2, (1000, output_dim), jnp.float32)
    out2 = deepset_discriminator(x2, params)
    jax.block_until_ready(out2)
    ref2 = _reference(x2, params)
    assert out2.shape == (1000, 1)
    assert jnp.allclose(out2, ref2, atol=1e-2, rtol=1e-2), \
        float(jnp.max(jnp.abs(out2 - ref2)))

    print("KERNEL_OK")
</pallas_src>

<mosaic_0001>
module attributes {stable_mosaic.version = 11 : i64} {
  func.func @_mlp_kernel(%arg0: i32, %arg1: memref<16x128xbf16, #tpu.memory_space<vmem>>, %arg2: memref<32x16xbf16, #tpu.memory_space<vmem>>, %arg3: memref<32x1xf32, #tpu.memory_space<vmem>>, %arg4: memref<32x32xbf16, #tpu.memory_space<vmem>>, %arg5: memref<32x1xf32, #tpu.memory_space<vmem>>, %arg6: memref<32x1xf32, #tpu.memory_space<vmem>>, %arg7: memref<1x1xf32, #tpu.memory_space<vmem>>, %arg8: memref<1x128xf32, #tpu.memory_space<vmem>>) attributes {dimension_semantics = [#tpu.dimension_semantics<parallel>], iteration_bounds = array<i64: 1>, scalar_prefetch = 0 : i64, scratch_operands = 0 : i64, tpu.core_type = #tpu.core_type<tc>, window_params = [{transform_indices = @transform_0, window_bounds = array<i64: 16, 128>}, {pipeline_mode = #tpu.pipeline_mode<synchronous>, transform_indices = @transform_1, window_bounds = array<i64: 32, 16>}, {pipeline_mode = #tpu.pipeline_mode<synchronous>, transform_indices = @transform_2, window_bounds = array<i64: 32, 1>}, {pipeline_mode = #tpu.pipeline_mode<synchronous>, transform_indices = @transform_3, window_bounds = array<i64: 32, 32>}, {pipeline_mode = #tpu.pipeline_mode<synchronous>, transform_indices = @transform_4, window_bounds = array<i64: 32, 1>}, {pipeline_mode = #tpu.pipeline_mode<synchronous>, transform_indices = @transform_5, window_bounds = array<i64: 32, 1>}, {pipeline_mode = #tpu.pipeline_mode<synchronous>, transform_indices = @transform_6, window_bounds = array<i64: 1, 1>}, {transform_indices = @transform_7, window_bounds = array<i64: 1, 128>}]} {
    %c0 = arith.constant 0 : index
    %c0_0 = arith.constant 0 : index
    %0 = vector.load %arg2[%c0, %c0_0] : memref<32x16xbf16, #tpu.memory_space<vmem>>, vector<32x16xbf16>
    %c0_1 = arith.constant 0 : index
    %c0_2 = arith.constant 0 : index
    %1 = vector.load %arg1[%c0_1, %c0_2] : memref<16x128xbf16, #tpu.memory_space<vmem>>, vector<16x128xbf16>
    %cst = arith.constant dense<0.000000e+00> : vector<32x128xf32>
    %2 = tpu.matmul %0, %1, %cst {dimension_numbers = #tpu.dot_dimension_numbers<[1], [0], [0], [1], [0, 0, 1, 1], [], []>} : vector<32x16xbf16>, vector<16x128xbf16>, vector<32x128xf32> -> vector<32x128xf32>
    %c0_3 = arith.constant 0 : index
    %c0_4 = arith.constant 0 : index
    %3 = vector.load %arg3[%c0_3, %c0_4] : memref<32x1xf32, #tpu.memory_space<vmem>>, vector<32x1xf32>
    %4 = vector.broadcast %3 : vector<32x1xf32> to vector<32x128xf32>
    %5 = arith.addf %2, %4 : vector<32x128xf32>
    %cst_5 = arith.constant 0.000000e+00 : f32
    %6 = vector.broadcast %cst_5 : f32 to vector<32x128xf32>
    %7 = arith.maximumf %5, %6 : vector<32x128xf32>
    %c0_6 = arith.constant 0 : index
    %c0_7 = arith.constant 0 : index
    %8 = vector.load %arg4[%c0_6, %c0_7] : memref<32x32xbf16, #tpu.memory_space<vmem>>, vector<32x32xbf16>
    %9 = arith.truncf %7 : vector<32x128xf32> to vector<32x128xbf16>
    %cst_8 = arith.constant dense<0.000000e+00> : vector<32x128xf32>
    %10 = tpu.matmul %8, %9, %cst_8 {dimension_numbers = #tpu.dot_dimension_numbers<[1], [0], [0], [1], [0, 0, 1, 1], [], []>} : vector<32x32xbf16>, vector<32x128xbf16>, vector<32x128xf32> -> vector<32x128xf32>
    %c0_9 = arith.constant 0 : index
    %c0_10 = arith.constant 0 : index
    %11 = vector.load %arg5[%c0_9, %c0_10] : memref<32x1xf32, #tpu.memory_space<vmem>>, vector<32x1xf32>
    %12 = vector.broadcast %11 : vector<32x1xf32> to vector<32x128xf32>
    %13 = arith.addf %10, %12 : vector<32x128xf32>
    %cst_11 = arith.constant 0.000000e+00 : f32
    %14 = vector.broadcast %cst_11 : f32 to vector<32x128xf32>
    %15 = arith.maximumf %13, %14 : vector<32x128xf32>
    %c0_12 = arith.constant 0 : index
    %c0_13 = arith.constant 0 : index
    %16 = vector.load %arg6[%c0_12, %c0_13] : memref<32x1xf32, #tpu.memory_space<vmem>>, vector<32x1xf32>
    %17 = vector.broadcast %16 : vector<32x1xf32> to vector<32x128xf32>
    %18 = arith.mulf %15, %17 : vector<32x128xf32>
    %cst_14 = arith.constant dense<0.000000e+00> : vector<128xf32>
    %19 = vector.multi_reduction <add>, %18, %cst_14 [0] : vector<32x128xf32> to vector<128xf32>
    %20 = vector.shape_cast %19 : vector<128xf32> to vector<1x128xf32>
    %c0_15 = arith.constant 0 : index
    %c0_16 = arith.constant 0 : index
    %21 = vector.load %arg7[%c0_15, %c0_16] : memref<1x1xf32, #tpu.memory_space<vmem>>, vector<1x1xf32>
    %22 = vector.broadcast %21 : vector<1x1xf32> to vector<1x128xf32>
    %23 = arith.addf %20, %22 : vector<1x128xf32>
    %cst_17 = arith.constant 0.000000e+00 : f32
    %24 = vector.broadcast %cst_17 : f32 to vector<1x128xf32>
    %25 = arith.subf %24, %23 : vector<1x128xf32>
    %26 = math.exp %25 : vector<1x128xf32>
    %cst_18 = arith.constant 1.000000e+00 : f32
    %27 = vector.broadcast %cst_18 : f32 to vector<1x128xf32>
    %28 = arith.addf %27, %26 : vector<1x128xf32>
    %29 = tpu.reciprocal %28 {approx = true} : vector<1x128xf32> -> vector<1x128xf32>
    %c0_19 = arith.constant 0 : index
    %c0_20 = arith.constant 0 : index
    %30 = vector.load %arg8[%c0_19, %c0_20] : memref<1x128xf32, #tpu.memory_space<vmem>>, vector<1x128xf32>
    tpu.vector_store %arg8[%c0_19, %c0_20], %29 {strides = array<i32>} : memref<1x128xf32, #tpu.memory_space<vmem>>, vector<1x128xf32>,
    return
  }
  func.func @transform_0(%arg0: i32) -> (i32, i32) {
    %c0_i32 = arith.constant 0 : i32
    %c0_i32_0 = arith.constant 0 : i32
    return %c0_i32, %arg0 : i32, i32
  }
  func.func @transform_1(%arg0: i32) -> (i32, i32) {
    %c0_i32 = arith.constant 0 : i32
    %c0_i32_0 = arith.constant 0 : i32
    %c0_i32_1 = arith.constant 0 : i32
    return %c0_i32, %c0_i32_0 : i32, i32
  }
  func.func @transform_2(%arg0: i32) -> (i32, i32) {
    %c0_i32 = arith.constant 0 : i32
    %c0_i32_0 = arith.constant 0 : i32
    %c0_i32_1 = arith.constant 0 : i32
    return %c0_i32, %c0_i32_0 : i32, i32
  }
  func.func @transform_3(%arg0: i32) -> (i32, i32) {
    %c0_i32 = arith.constant 0 : i32
    %c0_i32_0 = arith.constant 0 : i32
    %c0_i32_1 = arith.constant 0 : i32
    return %c0_i32, %c0_i32_0 : i32, i32
  }
  func.func @transform_4(%arg0: i32) -> (i32, i32) {
    %c0_i32 = arith.constant 0 : i32
    %c0_i32_0 = arith.constant 0 : i32
    %c0_i32_1 = arith.constant 0 : i32
    return %c0_i32, %c0_i32_0 : i32, i32
  }
  func.func @transform_5(%arg0: i32) -> (i32, i32) {
    %c0_i32 = arith.constant 0 : i32
    %c0_i32_0 = arith.constant 0 : i32
    %c0_i32_1 = arith.constant 0 : i32
    return %c0_i32, %c0_i32_0 : i32, i32
  }
  func.func @transform_6(%arg0: i32) -> (i32, i32) {
    %c0_i32 = arith.constant 0 : i32
    %c0_i32_0 = arith.constant 0 : i32
    %c0_i32_1 = arith.constant 0 : i32
    return %c0_i32, %c0_i32_0 : i32, i32
  }
  func.func @transform_7(%arg0: i32) -> (i32, i32) {
    %c0_i32 = arith.constant 0 : i32
    %c0_i32_0 = arith.constant 0 : i32
    return %c0_i32, %arg0 : i32, i32
  }
}

</mosaic_0001>

<llo_original>
// kernel: tpu_custom_call.1
$region0: #{tpu_custom_call.1}
  #allocation0 [shape = 'u32[]', space=smem, size = 0x4, offset = 0x4, fixed_abs, tag = 'smem constant byte address 0x4 - core index']
  #allocation1 [shape = 'u32[72,128]{1,0:T(1,128)}', space=vmem, size = 0x9000, scoped, tag = 'internal scratch']
  #allocation2 [shape = 'f32[1,1]{1,0:T(1,128)S(1)}', space=vmem, size = 0x200, scoped, tag = 'scoped memory for tpu_custom_call.1']
  %s0 = inlined_call_operand.vmem [shape: bf16[16,128], index: 0, kind: input, shape index: {}]
  %s1 = inlined_call_operand.vmem [shape: bf16[32,16], index: 1, kind: input, shape index: {}]
  %s2 = inlined_call_operand.vmem [shape: f32[32,1], index: 2, kind: input, shape index: {}]
  %s3 = inlined_call_operand.vmem [shape: bf16[32,32], index: 3, kind: input, shape index: {}]
  %s4 = inlined_call_operand.vmem [shape: f32[32,1], index: 4, kind: input, shape index: {}]
  %s5 = inlined_call_operand.vmem [shape: f32[32,1], index: 5, kind: input, shape index: {}]
  %s6 = inlined_call_operand.<no memory space> [shape: f32[1,1], index: 6, kind: input, shape index: {}]
  %s7 = inlined_call_operand.hbm [shape: f32[1,128], index: 7, kind: output, shape index: {}]
  %s8 = sld [smem:[#allocation0]]
  $region38: #{tpu_custom_call.1} parent=0
    _
  %s10 = ssub.s32 1, %s8
  %s11 = scalar_select 0, %s10, %s8
  %v12 = vstv %s6
  %13 = vst [vmem:[#allocation2] sm:$0x1] %v12
  $region1: #{tpu_custom_call.1} parent=0
    #allocation3 [shape = 'u8[512]{0}', space=vmem, size = 0x400, scoped, tag = 'output window, operand 0, single buffered']
    #allocation4 [shape = 's32[1]{0}', space=sflag, size = 0x4, scoped, tag = 'scoped memory for tpu_custom_call.1']
    %14 = vsyncpa [#allocation4], 0
    // Predicated region
    $region2: #{tpu_custom_call.1} parent=1 // pred_check
      _
    $region3: #{tpu_custom_call.1} parent=1 // pred_check_branch
      %16 = sbr.rel (0) target = $region5
    $region4: #{tpu_custom_call.1} parent=1 // pred_region
      _
    $region5: #{tpu_custom_call.1} parent=1 // pred_fallthru
      _
    // Predicated region
    $region6: #{tpu_custom_call.1} parent=1 // pred_check
      _
    $region7: #{tpu_custom_call.1} parent=1 // pred_check_branch
      %18 = sbr.rel (0) target = $region9
    $region8: #{tpu_custom_call.1} parent=1 // pred_region
      _
    $region9: #{tpu_custom_call.1} parent=1 // pred_fallthru
      _
    // Predicated region
    $region10: #{tpu_custom_call.1} parent=1 // pred_check
      _
    $region11: #{tpu_custom_call.1} parent=1 // pred_check_branch
      %20 = sbr.rel (0) target = $region13
    $region12: #{tpu_custom_call.1} parent=1 // pred_region
      _
    $region13: #{tpu_custom_call.1} parent=1 // pred_fallthru
      _
    // Predicated region
    $region14: #{tpu_custom_call.1} parent=1 // pred_check
      _
    $region15: #{tpu_custom_call.1} parent=1 // pred_check_branch
      %22 = sbr.rel (0) target = $region17
    $region16: #{tpu_custom_call.1} parent=1 // pred_region
      _
    $region17: #{tpu_custom_call.1} parent=1 // pred_fallthru
      _
    // Predicated region
    $region18: #{tpu_custom_call.1} parent=1 // pred_check
      _
    $region19: #{tpu_custom_call.1} parent=1 // pred_check_branch
      %24 = sbr.rel (0) target = $region21
    $region20: #{tpu_custom_call.1} parent=1 // pred_region
      _
    $region21: #{tpu_custom_call.1} parent=1 // pred_fallthru
      _
    // Predicated region
    $region22: #{tpu_custom_call.1} parent=1 // pred_check
      _
    $region23: #{tpu_custom_call.1} parent=1 // pred_check_branch
      %26 = sbr.rel (0) target = $region25
    $region24: #{tpu_custom_call.1} parent=1 // pred_region
      _
    $region25: #{tpu_custom_call.1} parent=1 // pred_fallthru
      _
    // Predicated region
    $region26: #{tpu_custom_call.1} parent=1 // pred_check
      _
    $region27: #{tpu_custom_call.1} parent=1 // pred_check_branch
      %28 = sbr.rel (0) target = $region29
    $region28: #{tpu_custom_call.1} parent=1 // pred_region
      _
    $region29: #{tpu_custom_call.1} parent=1 // pred_fallthru
      _
    %v30 = vld [vmem:[%s1] sm:$0xf]
    %v31 = vld [vmem:[%s1 + $0x4] sm:$0xf]
    %v32 = vld [vmem:[%s1 + $0x8] sm:$0xf]
    %v33 = vld [vmem:[%s1 + $0xc] sm:$0xf]
    %v34 = vld [vmem:[%s0] sm:$0xf]
    %v35 = vld [vmem:[%s0 + $0x4] sm:$0xf]
    %v36 = vld [vmem:[%s2] sm:$0xff]
    %v37 = vld [vmem:[%s2 + $0x8] sm:$0xff]
    %v38 = vld [vmem:[%s2 + $0x10] sm:$0xff]
    %v39 = vld [vmem:[%s2 + $0x18] sm:$0xff]
    %41 = vset.pattern.permute.xlu0 0
    %42 = vperm.xlu0 %41, %v36
    %v43 = vpop.permute.xlu0 %42
    %46 = vset.pattern.permute.xlu0 0
    %47 = vperm.xlu0 %46, %v37
    %v48 = vpop.permute.xlu0 %47
    %51 = vset.pattern.permute.xlu0 0
    %52 = vperm.xlu0 %51, %v38
    %v53 = vpop.permute.xlu0 %52
    %56 = vset.pattern.permute.xlu0 0
    %57 = vperm.xlu0 %56, %v39
    %v58 = vpop.permute.xlu0 %57
    %v64 = vunpack.c.l.b16 %v30
    %v65 = vunpack.c.l.b16 %v31
    %v66 = vunpack.c.l.b16 %v32
    %v67 = vunpack.c.l.b16 %v33
    %v68 = vpack.c.b16 %v65, %v64
    %v69 = vpack.c.b16 %v67, %v66
    %v72 = vunpack.c.l.b16 %v34
    %v73 = vunpack.c.l.b16 %v35
    %v74 = vpack.c.b16 %v73, %v72
    %vm76 = vcmask 130048
    %v78 = vsel %vm76, %v68, 0
    %v81 = vsel %vm76, %v69, 0
    %83 = vmatpush.bf16.msra.mxu0 0
    %84 = vmatpush.bf16.msra.mxu0 0
    %85 = vmatpush.bf16.msra.mxu0 0
    %86 = vmatpush.bf16.msra.mxu0 0
    %87 = vmatpush.bf16.msra.mxu0 0
    %88 = vmatpush.bf16.msra.mxu0 0
    %89 = vmatpush.bf16.msra.mxu0 0
    %90 = vmatpush.bf16.msra.mxu0 %v74
    %91 = vmatmul.bf16.gmra.mxu0 %v78
    %v92 = vpop.f32.mrf.mxu0
    %v93 = vadd.f32 %v43, %v92
    %v94 = vpop.f32.mrf.mxu0
    %v95 = vadd.f32 %v48, %v94
    %96 = vmatmul.bf16.gmra.mxu0 %v81
    %v97 = vpop.f32.mrf.mxu0
    %v98 = vadd.f32 %v53, %v97
    %v99 = vpop.f32.mrf.mxu0
    %v100 = vadd.f32 %v58, %v99
    %101 = vdwg.mxu0
    %v102 = vmax.f32 %v93, 0.0
    %v103 = vmax.f32 %v95, 0.0
    %v104 = vmax.f32 %v98, 0.0
    %v105 = vmax.f32 %v100, 0.0
    %v106 = vld [vmem:[%s3] sm:$0xf]
    %v107 = vld [vmem:[%s3 + $0x4] sm:$0xf]
    %v108 = vld [vmem:[%s3 + $0x8] sm:$0xf]
    %v109 = vld [vmem:[%s3 + $0xc] sm:$0xf]
    %v110 = vpack.c.bf16 %v103, %v102
    %v111 = vpack.c.bf16 %v105, %v104
    %v112 = vld [vmem:[%s4] sm:$0xff]
    %v113 = vld [vmem:[%s4 + $0x8] sm:$0xff]
    %v114 = vld [vmem:[%s4 + $0x10] sm:$0xff]
    %v115 = vld [vmem:[%s4 + $0x18] sm:$0xff]
    %117 = vset.pattern.permute.xlu0 0
    %118 = vperm.xlu0 %117, %v112
    %v119 = vpop.permute.xlu0 %118
    %122 = vset.pattern.permute.xlu0 0
    %123 = vperm.xlu0 %122, %v113
    %v124 = vpop.permute.xlu0 %123
    %127 = vset.pattern.permute.xlu0 0
    %128 = vperm.xlu0 %127, %v114
    %v129 = vpop.permute.xlu0 %128
    %132 = vset.pattern.permute.xlu0 0
    %133 = vperm.xlu0 %132, %v115
    %v134 = vpop.permute.xlu0 %133
    %v140 = vunpack.c.l.b16 %v106
    %v141 = vunpack.c.l.b16 %v107
    %v142 = vunpack.c.l.b16 %v108
    %v143 = vunpack.c.l.b16 %v109
    %v144 = vpack.c.b16 %v141, %v140
    %v145 = vpack.c.b16 %v143, %v142
    %vm146 = vcmask 261120
    %v148 = vsel %vm146, %v144, 0
    %v151 = vsel %vm146, %v145, 0
    %153 = vmatpush.bf16.msra.mxu0 0
    %154 = vmatpush.bf16.msra.mxu0 0
    %155 = vmatpush.bf16.msra.mxu0 0
    %156 = vmatpush.bf16.msra.mxu0 0
    %157 = vmatpush.bf16.msra.mxu0 0
    %158 = vmatpush.bf16.msra.mxu0 0
    %159 = vmatpush.bf16.msra.mxu0 %v111
    %160 = vmatpush.bf16.msra.mxu0 %v110
    %161 = vmatmul.bf16.gmra.mxu0 %v148
    %v162 = vpop.f32.mrf.mxu0
    %v163 = vadd.f32 %v119, %v162
    %v164 = vpop.f32.mrf.mxu0
    %v165 = vadd.f32 %v124, %v164
    %166 = vmatmul.bf16.gmra.mxu0 %v151
    %v167 = vpop.f32.mrf.mxu0
    %v168 = vadd.f32 %v129, %v167
    %v169 = vpop.f32.mrf.mxu0
    %v170 = vadd.f32 %v134, %v169
    %171 = vdwg.mxu0
    %v172 = vmax.f32 %v163, 0.0
    %v173 = vmax.f32 %v165, 0.0
    %v174 = vmax.f32 %v168, 0.0
    %v175 = vmax.f32 %v170, 0.0
    %v176 = vld [vmem:[%s5] sm:$0xff]
    %v177 = vld [vmem:[%s5 + $0x8] sm:$0xff]
    %v178 = vld [vmem:[%s5 + $0x10] sm:$0xff]
    %v179 = vld [vmem:[%s5 + $0x18] sm:$0xff]
    %181 = vset.pattern.permute.xlu0 0
    %182 = vperm.xlu0 %181, %v176
    %v183 = vpop.permute.xlu0 %182
    %186 = vset.pattern.permute.xlu0 0
    %187 = vperm.xlu0 %186, %v177
    %v188 = vpop.permute.xlu0 %187
    %191 = vset.pattern.permute.xlu0 0
    %192 = vperm.xlu0 %191, %v178
    %v193 = vpop.permute.xlu0 %192
    %196 = vset.pattern.permute.xlu0 0
    %197 = vperm.xlu0 %196, %v179
    %v198 = vpop.permute.xlu0 %197
    %v200 = vmul.f32 %v172, %v183
    %v201 = vmul.f32 %v173, %v188
    %v202 = vmul.f32 %v174, %v193
    %v203 = vmul.f32 %v175, %v198
    %v204 = vadd.f32 %v200, %v201
    %v205 = vadd.f32 %v204, %v202
    %v206 = vadd.f32 %v205, %v203
    %v207 = vrot.slane %v206, 4
    %v208 = vadd.f32 %v206, %v207
    %v209 = vrot.slane %v208, 2
    %v210 = vadd.f32 %v208, %v209
    %v211 = vrot.slane %v210, 1
    %v212 = vadd.f32 %v210, %v211
    %v213 = vld [vmem:[#allocation2] sm:$0x1]
    %215 = vset.pattern.permute.xlu0 0
    %216 = vperm.xlu0 %215, %v213
    %v217 = vpop.permute.xlu0 %216
    %v219 = vperm.slane %v217, 0
    %v220 = vadd.f32 %v212, %v219
    %v221 = vsub.f32 0.0, %v220
    %v222 = vmul.f32 %v221, 1.442695
    %v223 = vpow.pop %v222
    %v224 = vadd.f32 %v223, 1.0
    %v225 = vrcp.pop %v224
    %226 = vst [vmem:[#allocation3] sm:$0x1] %v225
    // Predicated region
    $region30: #{tpu_custom_call.1} parent=1 // pred_check
      _
    $region31: #{tpu_custom_call.1} parent=1 // pred_check_branch
      %228 = sbr.rel (0) target = $region33
    $region32: #{tpu_custom_call.1} parent=1 // pred_region
      %230 = vsyncadd [#allocation4], 0
      %s232 = sshll.u32 [#allocation3], 4
      %s233 = int_to_ptr.vmem [resolvable:$true] %s232
      %s234 = sshll.u32 %s7, 4
      %s235 = int_to_ptr.hbm [resolvable:$true] %s234
      %237 = dma.vmem_to_hbm [thread:$0]  %s233, 16, %s235, [#allocation4]
    $region33: #{tpu_custom_call.1} parent=1 // pred_fallthru
      _
    // Predicated region
    $region34: #{tpu_custom_call.1} parent=1 // pred_check
      _
    $region35: #{tpu_custom_call.1} parent=1 // pred_check_branch
      %239 = sbr.rel (0) target = $region37
    $region36: #{tpu_custom_call.1} parent=1 // pred_region
      %241 = dma.done [#allocation4], 16
    $region37: #{tpu_custom_call.1} parent=1 // pred_fallthru
      _
    %242 = vsyncpa [#allocation4], 1

</llo_original>
